<compile_context>
chip_gen: v6e
topology: v6e:2x2x1
jax: 0.10.0
libtpu: 0.0.40
codegen_flags: <defaults>
</compile_context>

<pallas_src>
import math

import jax
import jax.numpy as jnp
from jax.experimental import pallas as pl
from jax.experimental.pallas import tpu as pltpu


_LANE = 128
_SUBLANE = 8
_BLOCK_TARGET_BYTES = 2 * 1024 * 1024     # ~2 MiB per block (x / out / pe each)
_VMEM_LIMIT_BYTES = 32 * 1024 * 1024      # explicit scoped-VMEM limit, all gens
_XLA_FALLBACK_BYTES = 1 * 1024 * 1024     # below this a fused XLA add is faster


def _round_up(v, m):
    return ((v + m - 1) // m) * m


def _round_down(v, m):
    return (v // m) * m


def _pe_add_kernel(x_ref, pe_ref, o_ref):
    # Broadcast add: pe block has a degenerate batch dim in both layouts.
    o_ref[...] = x_ref[...] + pe_ref[...]


def make_pe_table(max_len, d_model, dtype=jnp.float32):
    """Sinusoidal positional-encoding table, identical to the PyTorch buffer."""
    position = jnp.arange(max_len, dtype=jnp.float32)[:, None]            # (L, 1)
    div_term = jnp.exp(
        jnp.arange(0, d_model, 2, dtype=jnp.float32)
        * (-math.log(10000.0) / d_model)
    )                                                                     # (D/2,)
    ang = position * div_term                                             # (L, D/2)
    pe = jnp.zeros((max_len, d_model), jnp.float32)
    pe = pe.at[:, 0::2].set(jnp.sin(ang))
    pe = pe.at[:, 1::2].set(jnp.cos(ang))
    return pe.astype(dtype)


def _pe_add_rows(x, pe_table, cost, x_bytes):
    """Dense-sublane path for D % 128 == 0: x stays (B, S, D), PE is (S, D)."""
    B, S, D = x.shape
    elem_bytes = x.dtype.itemsize
    pe = pe_table[:S, :].astype(x.dtype)          # constant-folds once under jit

    # Rows of S per block: multiple of 8, ~2 MiB per block.
    ts = _round_down(max(_SUBLANE, _BLOCK_TARGET_BYTES // (D * elem_bytes)),
                     _SUBLANE)
    ts = max(_SUBLANE, min(ts, _round_up(S, _SUBLANE)))
    ns = pl.cdiv(S, ts)

    # v7x: ensure a large single-block problem still yields >= 2 grid steps.
    if x_bytes >= _XLA_FALLBACK_BYTES and ns * B == 1 and ts > _SUBLANE:
        ts = _round_up(pl.cdiv(ts, 2), _SUBLANE)
        ns = pl.cdiv(S, ts)

    if B == 1:
        grid = (ns,)
        x_spec = pl.BlockSpec((1, ts, D), lambda s: (0, s, 0))
        pe_spec = pl.BlockSpec((ts, D), lambda s: (s, 0))
        sem = ("parallel",)
    else:
        grid = (ns, B)  # batch innermost -> PE block stays resident
        x_spec = pl.BlockSpec((1, ts, D), lambda s, b: (b, s, 0))
        pe_spec = pl.BlockSpec((ts, D), lambda s, b: (s, 0))
        sem = ("parallel", "parallel")

    return pl.pallas_call(
        _pe_add_kernel,
        out_shape=jax.ShapeDtypeStruct((B, S, D), x.dtype),
        grid_spec=pltpu.PrefetchScalarGridSpec(
            num_scalar_prefetch=0,
            grid=grid,
            in_specs=[x_spec, pe_spec],
            out_specs=x_spec,
        ),
        compiler_params=pltpu.CompilerParams(
            dimension_semantics=sem,
            vmem_limit_bytes=_VMEM_LIMIT_BYTES,
        ),
        cost_estimate=cost,
    )(x, pe)


def _pe_add_flat(x, pe_table, cost, x_bytes):
    """Lane-dense path for D % 128 != 0: (S, D) flattened into one lane axis."""
    B, S, D = x.shape
    N = S * D
    elem_bytes = x.dtype.itemsize
    xf = x.reshape(B, N)                                   # contiguous, free
    pef = pe_table[:S, :].reshape(1, N).astype(x.dtype)    # folds once under jit

    # Lane tile: fixed 128-aligned size budgeted for 8 live (padded) sublanes.
    tn = max(_LANE,
             _round_down(_BLOCK_TARGET_BYTES // (_SUBLANE * elem_bytes), _LANE))
    tn = min(tn, _round_up(N, _LANE))

    # Batch rows per block: full B when small, else multiples of 8 within budget.
    if B <= _SUBLANE:
        tb = B
    else:
        tb = _SUBLANE
        while tb * 2 <= B and (tb * 2) * tn * elem_bytes <= _BLOCK_TARGET_BYTES:
            tb *= 2

    nn = pl.cdiv(N, tn)
    nb = pl.cdiv(B, tb)

    # v7x: split the stream so the second TensorCore gets work.
    if x_bytes >= _XLA_FALLBACK_BYTES and nn * nb == 1 and tn > _LANE:
        tn = _round_up(pl.cdiv(tn, 2), _LANE)
        nn = pl.cdiv(N, tn)

    if nb == 1:
        grid = (nn,)
        x_spec = pl.BlockSpec((tb, tn), lambda j: (0, j))
        pe_spec = pl.BlockSpec((1, tn), lambda j: (0, j))
        sem = ("parallel",)
    else:
        grid = (nn, nb)  # batch innermost -> PE block stays resident
        x_spec = pl.BlockSpec((tb, tn), lambda j, i: (i, j))
        pe_spec = pl.BlockSpec((1, tn), lambda j, i: (0, j))
        sem = ("parallel", "parallel")

    out = pl.pallas_call(
        _pe_add_kernel,
        out_shape=jax.ShapeDtypeStruct((B, N), x.dtype),
        grid_spec=pltpu.PrefetchScalarGridSpec(
            num_scalar_prefetch=0,
            grid=grid,
            in_specs=[x_spec, pe_spec],
            out_specs=x_spec,
        ),
        compiler_params=pltpu.CompilerParams(
            dimension_semantics=sem,
            vmem_limit_bytes=_VMEM_LIMIT_BYTES,
        ),
        cost_estimate=cost,
    )(xf, pef)
    return out.reshape(B, S, D)


def positional_encoding(x, pe_table, *, force_pallas=False):
    """Forward of PositionalEncoding: x + pe[:S].  x: [B, S, D], pe: [L, D]."""
    B, S, D = x.shape
    if pe_table.shape[0] < S:
        raise ValueError(
            f"max_len={pe_table.shape[0]} is smaller than sequence length {S}")
    if pe_table.shape[1] != D:
        raise ValueError("d_model mismatch between x and pe_table")

    elem_bytes = x.dtype.itemsize
    x_bytes = B * S * D * elem_bytes

    # Small-size escape hatch: pallas_call dispatch + DMA setup dominate below
    # ~1 MiB; a fused XLA broadcast add is strictly faster there.
    if not force_pallas and x_bytes < _XLA_FALLBACK_BYTES:
        return x + pe_table[None, :S, :].astype(x.dtype)

    cost = pl.CostEstimate(
        flops=B * S * D,
        transcendentals=0,
        bytes_accessed=(2 * B * S * D + S * D) * elem_bytes,
    )

    if D % _LANE == 0:
        return _pe_add_rows(x, pe_table, cost, x_bytes)
    return _pe_add_flat(x, pe_table, cost, x_bytes)


def reference(x, pe_table):
    """Pure-JAX reference of the PyTorch forward."""
    S = x.shape[1]
    return x + pe_table[None, :S, :].astype(x.dtype)


if __name__ == "__main__":
    MAX_LEN = 5000  # module default
    key = jax.random.PRNGKey(0)
    k1, k2 = jax.random.split(key)

    # Case 1: small d_model (< 128) -> flattened (B, S*D) lane-dense path.
    B, S, D = 2, 8, 32
    x1 = jax.random.normal(k1, (B, S, D), jnp.float32)
    pe1 = make_pe_table(MAX_LEN, D)
    out1 = jax.block_until_ready(positional_encoding(x1, pe1, force_pallas=True))
    ref1 = reference(x1, pe1)
    assert out1.shape == (B, S, D)
    assert jnp.allclose(out1, ref1, atol=1e-6, rtol=1e-6), "flat path mismatch"

    # Case 2: lane-aligned d_model (multiple of 128) -> sublane-dense 3-D path.
    B2, S2, D2 = 2, 16, 128
    x2 = jax.random.normal(k2, (B2, S2, D2), jnp.float32)
    pe2 = make_pe_table(MAX_LEN, D2)
    out2 = jax.block_until_ready(positional_encoding(x2, pe2, force_pallas=True))
    ref2 = reference(x2, pe2)
    assert out2.shape == (B2, S2, D2)
    assert jnp.allclose(out2, ref2, atol=1e-6, rtol=1e-6), "rows path mismatch"

    # Case 3: small-size escape hatch (fused XLA add, no pallas_call dispatch).
    out3 = jax.block_until_ready(positional_encoding(x1, pe1))
    assert jnp.allclose(out3, ref1, atol=1e-6, rtol=1e-6), "fallback mismatch"

    print("KERNEL_OK")
</pallas_src>

<mosaic_0001>
module attributes {stable_mosaic.version = 11 : i64} {
  func.func @_pe_add_kernel(%arg0: i32, %arg1: memref<2x256xf32, #tpu.memory_space<vmem>>, %arg2: memref<1x256xf32, #tpu.memory_space<vmem>>, %arg3: memref<2x256xf32, #tpu.memory_space<vmem>>) attributes {dimension_semantics = [#tpu.dimension_semantics<parallel>], iteration_bounds = array<i64: 1>, scalar_prefetch = 0 : i64, scratch_operands = 0 : i64, tpu.core_type = #tpu.core_type<tc>, window_params = [{transform_indices = @transform_0, window_bounds = array<i64: 2, 256>}, {transform_indices = @transform_1, window_bounds = array<i64: 1, 256>}, {transform_indices = @transform_2, window_bounds = array<i64: 2, 256>}]} {
    %c0 = arith.constant 0 : index
    %c0_0 = arith.constant 0 : index
    %0 = vector.load %arg1[%c0, %c0_0] : memref<2x256xf32, #tpu.memory_space<vmem>>, vector<2x256xf32>
    %c0_1 = arith.constant 0 : index
    %c0_2 = arith.constant 0 : index
    %1 = vector.load %arg2[%c0_1, %c0_2] : memref<1x256xf32, #tpu.memory_space<vmem>>, vector<1x256xf32>
    %2 = vector.broadcast %1 : vector<1x256xf32> to vector<2x256xf32>
    %3 = arith.addf %0, %2 : vector<2x256xf32>
    %c0_3 = arith.constant 0 : index
    %c0_4 = arith.constant 0 : index
    %4 = vector.load %arg3[%c0_3, %c0_4] : memref<2x256xf32, #tpu.memory_space<vmem>>, vector<2x256xf32>
    tpu.vector_store %arg3[%c0_3, %c0_4], %3 {strides = array<i32>} : memref<2x256xf32, #tpu.memory_space<vmem>>, vector<2x256xf32>,
    return
  }
  func.func @transform_0(%arg0: i32) -> (i32, i32) {
    %c0_i32 = arith.constant 0 : i32
    %c0_i32_0 = arith.constant 0 : i32
    return %c0_i32, %arg0 : i32, i32
  }
  func.func @transform_1(%arg0: i32) -> (i32, i32) {
    %c0_i32 = arith.constant 0 : i32
    %c0_i32_0 = arith.constant 0 : i32
    return %c0_i32, %arg0 : i32, i32
  }
  func.func @transform_2(%arg0: i32) -> (i32, i32) {
    %c0_i32 = arith.constant 0 : i32
    %c0_i32_0 = arith.constant 0 : i32
    return %c0_i32, %arg0 : i32, i32
  }
}

</mosaic_0001>

<llo_original>
// kernel: tpu_custom_call.1
$region0: #{tpu_custom_call.1}
  #allocation0 [shape = 'u32[]', space=smem, size = 0x4, offset = 0x4, fixed_abs, tag = 'smem constant byte address 0x4 - core index']
  #allocation1 [shape = 'u32[144,128]{1,0:T(1,128)}', space=vmem, size = 0x12000, scoped, tag = 'internal scratch']
  %s0 = inlined_call_operand.hbm [shape: f32[2,256], index: 0, kind: input, shape index: {}]
  %s1 = inlined_call_operand.hbm [shape: f32[1,256], index: 1, kind: input, shape index: {}]
  %s2 = inlined_call_operand.hbm [shape: f32[2,256], index: 2, kind: output, shape index: {}]
  %s3 = sld [smem:[#allocation0]]
  $region26: #{tpu_custom_call.1} parent=0
    _
  %s5 = ssub.s32 1, %s3
  %s6 = scalar_select 0, %s5, %s3
  $region1: #{tpu_custom_call.1} parent=0
    #allocation2 [shape = 'u8[2048]{0}', space=vmem, size = 0x800, scoped, tag = 'input window, operand 0, single buffered']
    #allocation3 [shape = 's32[1]{0}', space=sflag, size = 0x4, scoped, tag = 'scoped memory for tpu_custom_call.1']
    #allocation4 [shape = 's32[1]{0}', space=sflag, size = 0x4, scoped, tag = 'scoped memory for tpu_custom_call.1']
    #allocation5 [shape = 'u8[1024]{0}', space=vmem, size = 0x400, scoped, tag = 'input window, operand 1, single buffered']
    #allocation6 [shape = 's32[1]{0}', space=sflag, size = 0x4, scoped, tag = 'scoped memory for tpu_custom_call.1']
    #allocation7 [shape = 'u8[2048]{0}', space=vmem, size = 0x800, scoped, tag = 'output window, operand 0, single buffered']
    %7 = vsyncpa [#allocation3], 0
    %8 = vsyncpa [#allocation6], 0
    %9 = vsyncpa [#allocation4], 0
    // Predicated region
    $region2: #{tpu_custom_call.1} parent=1 // pred_check
      _
    $region3: #{tpu_custom_call.1} parent=1 // pred_check_branch
      %11 = sbr.rel (0) target = $region5
    $region4: #{tpu_custom_call.1} parent=1 // pred_region
      %s13 = ssub.s32 64, 64
      %14 = vsyncadd [#allocation3], %s13
      %s16 = sshll.u32 [#allocation2], 4
      %s17 = int_to_ptr.vmem [resolvable:$true] %s16
      %19 = dma.hbm_to_vmem [thread:$0]  %s0, 64, %s17, [#allocation3]
    $region5: #{tpu_custom_call.1} parent=1 // pred_fallthru
      _
    // Predicated region
    $region6: #{tpu_custom_call.1} parent=1 // pred_check
      _
    $region7: #{tpu_custom_call.1} parent=1 // pred_check_branch
      %21 = sbr.rel (0) target = $region9
    $region8: #{tpu_custom_call.1} parent=1 // pred_region
      %s23 = ssub.s32 32, 32
      %24 = vsyncadd [#allocation6], %s23
      %s26 = sshll.u32 [#allocation5], 4
      %s27 = int_to_ptr.vmem [resolvable:$true] %s26
      %29 = dma.hbm_to_vmem [thread:$0]  %s1, 32, %s27, [#allocation6]
    $region9: #{tpu_custom_call.1} parent=1 // pred_fallthru
      _
    // Predicated region
    $region10: #{tpu_custom_call.1} parent=1 // pred_check
      _
    $region11: #{tpu_custom_call.1} parent=1 // pred_check_branch
      %31 = sbr.rel (0) target = $region13
    $region12: #{tpu_custom_call.1} parent=1 // pred_region
      %32 = dma.done [#allocation3], 64
    $region13: #{tpu_custom_call.1} parent=1 // pred_fallthru
      _
    // Predicated region
    $region14: #{tpu_custom_call.1} parent=1 // pred_check
      _
    $region15: #{tpu_custom_call.1} parent=1 // pred_check_branch
      %34 = sbr.rel (0) target = $region17
    $region16: #{tpu_custom_call.1} parent=1 // pred_region
      %35 = dma.done [#allocation6], 32
    $region17: #{tpu_custom_call.1} parent=1 // pred_fallthru
      _
    %v36 = vld [vmem:[#allocation2] sm:$0xf]
    %v37 = vld [vmem:[#allocation5] sm:$0x3]
    %v39 = vlaneseq
    %v40 = vshrl.u32 %v39, 7
    %v41 = vsub.s32 0, %v40
    %v42 = vrot.slane %v37, %v41
    %v43 = vlaneseq
    %v44 = vshrl.u32 %v43, 7
    %v45 = vsub.s32 1, %v44
    %v46 = vrot.slane %v37, %v45
    %v47 = vcombine.low %v42, %v46
    %v49 = vunpack.c.l.s4 1983009808
    %v50 = vunpack.c.0.s8 %v49
    %v51 = vlaneseq
    %v52 = vshrl.u32 %v51, 7
    %v53 = vsub.s32 %v50, %v52
    %v54 = vrot.slane %v47, %v53
    %v56 = vadd.f32 %v36, %v54
    %57 = vst [vmem:[#allocation7] sm:$0xf] %v56
    // Predicated region
    $region18: #{tpu_custom_call.1} parent=1 // pred_check
      _
    $region19: #{tpu_custom_call.1} parent=1 // pred_check_branch
      %59 = sbr.rel (0) target = $region21
    $region20: #{tpu_custom_call.1} parent=1 // pred_region
      %s61 = ssub.s32 64, 64
      %62 = vsyncadd [#allocation4], %s61
      %s64 = sshll.u32 [#allocation7], 4
      %s65 = int_to_ptr.vmem [resolvable:$true] %s64
      %67 = dma.vmem_to_hbm [thread:$0]  %s65, 64, %s2, [#allocation4]
    $region21: #{tpu_custom_call.1} parent=1 // pred_fallthru
      _
    // Predicated region
    $region22: #{tpu_custom_call.1} parent=1 // pred_check
      _
    $region23: #{tpu_custom_call.1} parent=1 // pred_check_branch
      %69 = sbr.rel (0) target = $region25
    $region24: #{tpu_custom_call.1} parent=1 // pred_region
      %70 = dma.done [#allocation4], 64
    $region25: #{tpu_custom_call.1} parent=1 // pred_fallthru
      _
    %71 = vsyncpa [#allocation3], 1
    %72 = vsyncpa [#allocation6], 1
    %73 = vsyncpa [#allocation4], 1

</llo_original>
